<compile_context>
chip_gen: v5e
topology: v5e:2x2
jax: 0.10.0
libtpu: 0.0.40
codegen_flags: <defaults>
</compile_context>

<pallas_src>
import jax
import jax.numpy as jnp
from jax.experimental import pallas as pl
from jax.experimental.pallas import tpu as pltpu


_VMEM_LIMIT = 32 * 1024 * 1024        # explicit scoped-VMEM budget (safe on v5e/v6e/v7x)
_BLOCK_BYTES_TARGET = 2 << 20         # ~2 MiB per pipelined input block


def _divisor_tile(total, target, quantum):
    """Largest multiple of `quantum` that divides `total` and is <= target, else `total`."""
    if total <= target:
        return total
    t = (min(total, target) // quantum) * quantum
    while t >= quantum:
        if total % t == 0:
            return t
        t -= quantum
    return total


def _pick_spatial_tile(S, Cin, itemsize=2):
    """Lane tile for the conv: multiple of 128 dividing S when possible."""
    if S <= 512:
        return S
    target = max(128, min(4096, _BLOCK_BYTES_TARGET // (9 * Cin * itemsize)))
    target = max(128, (target // 128) * 128)
    t = target
    while t >= 128:
        if S % t == 0:
            return t
        t -= 128
    return target   # fall back to a cdiv grid; Pallas masks the partial tail block


# --------------------------------------------------------------------------
# with_conv=True : 3x3 / stride-2 / pad-1 conv  ->  tiled (Cout, S) matmul
# --------------------------------------------------------------------------
def _conv_mm_kernel(p_ref, w_ref, b_ref, o_ref):
    # p_ref: (9*Cin, ts) bf16   w_ref: (Cout, 9*Cin) bf16   b_ref: (Cout, 1) f32
    acc = jnp.dot(w_ref[...], p_ref[...], preferred_element_type=jnp.float32)
    o_ref[...] = (acc + b_ref[...]).astype(o_ref.dtype)


@jax.jit
def _conv2d_s2_p1(x_nchw, weight, bias):
    """weight: (Cout, Cin, 3, 3) torch OIHW layout; bias: (Cout,)."""
    N, Cin, H, W = x_nchw.shape
    Cout = weight.shape[0]
    Ho = (H - 1) // 2 + 1
    Wo = (W - 1) // 2 + 1
    S = Ho * Wo

    # ---- wrapper glue (pure layout, fused by XLA): tap-major patches, bf16 ----
    xp = jnp.pad(x_nchw, ((0, 0), (0, 0), (1, 1), (1, 1)))            # pad=1
    taps = [xp[:, :, kh:kh + 2 * Ho - 1:2, kw:kw + 2 * Wo - 1:2]      # (N, Cin, Ho, Wo)
            for kh in range(3) for kw in range(3)]
    p = jnp.concatenate(taps, axis=1).reshape(N, 9 * Cin, S)
    p = p.astype(jnp.bfloat16)
    # (Cout, Cin, 3, 3) -> (Cout, kh, kw, Cin) -> (Cout, 9*Cin): columns match tap order
    w_mm = jnp.transpose(weight, (0, 2, 3, 1)).reshape(Cout, 9 * Cin).astype(jnp.bfloat16)
    b = bias.reshape(Cout, 1).astype(jnp.float32)

    ts = _pick_spatial_tile(S, Cin)
    grid = (N, pl.cdiv(S, ts))

    flops = 2 * N * S * 9 * Cin * Cout
    bytes_accessed = p.size * 2 + w_mm.size * 2 + b.size * 4 + N * Cout * S * 4

    out = pl.pallas_call(
        _conv_mm_kernel,
        out_shape=jax.ShapeDtypeStruct((N, Cout, S), x_nchw.dtype),
        grid=grid,
        in_specs=[
            pl.BlockSpec((None, 9 * Cin, ts), lambda n, s: (n, 0, s)),
            pl.BlockSpec((Cout, 9 * Cin), lambda n, s: (0, 0)),
            pl.BlockSpec((Cout, 1), lambda n, s: (0, 0)),
        ],
        out_specs=pl.BlockSpec((None, Cout, ts), lambda n, s: (n, 0, s)),
        compiler_params=pltpu.CompilerParams(
            dimension_semantics=("parallel", "parallel"),
            vmem_limit_bytes=_VMEM_LIMIT),
        cost_estimate=pl.CostEstimate(
            flops=flops, transcendentals=0, bytes_accessed=bytes_accessed),
    )(p, w_mm, b)

    # (N, Cout, Ho*Wo) -> NCHW is a free contiguous reshape (no transpose pass)
    return out.reshape(N, Cout, Ho, Wo)


# --------------------------------------------------------------------------
# with_conv=False : avg_pool3d(k=2, s=2) over (C, H, W) of an NCHW tensor
# --------------------------------------------------------------------------
@jax.jit
def _avg_pool3d_k2_s2(x_nchw):
    N, C, H, W = x_nchw.shape
    C2, H2, W2 = C // 2, H // 2, W // 2
    # floor behaviour of avg_pool(k=2, s=2): drop trailing odd elements
    x = x_nchw[:, :2 * C2, :2 * H2, :2 * W2]
    G = N * C2
    Wc = 2 * W2                  # (cropped) input width
    D = 2 * Wc                   # lane dim of the free view: (row-parity, w) pairs

    # Free, contiguous view -- nothing is materialized in HBM before the kernel.
    xv = x.reshape(G, 2, H2, D)

    # 0/1 matrix summing adjacent W columns on the MXU (small: Wc x W2, f32).
    pw = (jnp.arange(Wc)[:, None] // 2 == jnp.arange(W2)[None, :]).astype(jnp.float32)

    # Tile H2 (sublane dim) so each pipelined input block is ~_BLOCK_BYTES_TARGET.
    row_bytes = 2 * D * x.dtype.itemsize
    if H2 * row_bytes <= _BLOCK_BYTES_TARGET or H2 % 8 != 0:
        th2 = H2
    else:
        th2 = _divisor_tile(H2, max(8, _BLOCK_BYTES_TARGET // row_bytes), 8)
    grid = (G, H2 // th2)

    def kernel(x_ref, pw_ref, o_ref):
        xx = x_ref[...].astype(jnp.float32)          # (2, th2, D)  f32 accumulation
        s = xx[0] + xx[1]                            # channel-pair sum   (th2, D)
        s = s[:, :Wc] + s[:, Wc:]                    # row-pair sum       (th2, Wc)
        o = jnp.dot(s, pw_ref[...],
                    preferred_element_type=jnp.float32)  # col-pair sum   (th2, W2)
        o_ref[...] = (o * 0.125).astype(o_ref.dtype)

    flops = G * H2 * (2 * Wc * W2 + 3 * D)
    bytes_accessed = (xv.size + G * H2 * W2) * x.dtype.itemsize + pw.size * 4

    out = pl.pallas_call(
        kernel,
        out_shape=jax.ShapeDtypeStruct((G, H2, W2), x_nchw.dtype),
        grid=grid,
        in_specs=[
            pl.BlockSpec((None, 2, th2, D), lambda g, h: (g, 0, h, 0)),
            pl.BlockSpec((Wc, W2), lambda g, h: (0, 0)),
        ],
        out_specs=pl.BlockSpec((None, th2, W2), lambda g, h: (g, h, 0)),
        compiler_params=pltpu.CompilerParams(
            dimension_semantics=("parallel", "parallel"),
            vmem_limit_bytes=_VMEM_LIMIT),
        cost_estimate=pl.CostEstimate(
            flops=flops, transcendentals=0, bytes_accessed=bytes_accessed),
    )(xv, pw)

    return out.reshape(N, C2, H2, W2)


# --------------------------------------------------------------------------
# Module-equivalent wrapper
# --------------------------------------------------------------------------
def downsample(x_nchw, with_conv, weight=None, bias=None):
    if with_conv:
        return _conv2d_s2_p1(x_nchw, weight, bias)
    return _avg_pool3d_k2_s2(x_nchw)


if __name__ == "__main__":
    key = jax.random.PRNGKey(0)
    k1, k2, k3 = jax.random.split(key, 3)
    N, C, H, W = 2, 4, 16, 16
    x = jax.random.normal(k1, (N, C, H, W), jnp.float32)

    # Deterministic synthetic parameters for Conv2d(C, C, 3, 2, 1)
    weight = 0.1 * jax.random.normal(k2, (C, C, 3, 3), jnp.float32)
    bias = 0.1 * jax.random.normal(k3, (C,), jnp.float32)

    # ---- with_conv=True branch (bf16 operands, f32 accumulation) ----
    y_conv = jax.block_until_ready(downsample(x, True, weight, bias))
    assert y_conv.shape == (N, C, H // 2, W // 2)
    xq = x.astype(jnp.bfloat16).astype(jnp.float32)
    wq = weight.astype(jnp.bfloat16).astype(jnp.float32)
    y_ref = jax.lax.conv_general_dilated(
        xq, wq, window_strides=(2, 2), padding=((1, 1), (1, 1)),
        dimension_numbers=("NCHW", "OIHW", "NCHW"),
        precision=jax.lax.Precision.HIGHEST) + bias.reshape(1, C, 1, 1)
    assert jnp.allclose(y_conv, y_ref, rtol=1e-2, atol=1e-2), (
        float(jnp.max(jnp.abs(y_conv - y_ref))))

    # ---- with_conv=False branch (avg_pool3d over C, H, W) ----
    y_pool = jax.block_until_ready(downsample(x, False))
    assert y_pool.shape == (N, C // 2, H // 2, W // 2)
    pool_ref = jnp.mean(
        x.reshape(N, C // 2, 2, H // 2, 2, W // 2, 2), axis=(2, 4, 6))
    assert jnp.allclose(y_pool, pool_ref, rtol=1e-5, atol=1e-5), (
        float(jnp.max(jnp.abs(y_pool - pool_ref))))

    print("KERNEL_OK")
</pallas_src>

<mosaic_0001>
module attributes {stable_mosaic.version = 11 : i64} {
  func.func @_conv_mm_kernel(%arg0: i32, %arg1: i32, %arg2: memref<1x36x64xbf16, #tpu.memory_space<vmem>>, %arg3: memref<4x36xbf16, #tpu.memory_space<vmem>>, %arg4: memref<4x1xf32, #tpu.memory_space<vmem>>, %arg5: memref<1x4x64xf32, #tpu.memory_space<vmem>>) attributes {dimension_semantics = [#tpu.dimension_semantics<parallel>, #tpu.dimension_semantics<parallel>], iteration_bounds = array<i64: 2, 1>, scalar_prefetch = 0 : i64, scratch_operands = 0 : i64, tpu.core_type = #tpu.core_type<tc>, window_params = [{transform_indices = @transform_0, window_bounds = array<i64: 1, 36, 64>}, {pipeline_mode = #tpu.pipeline_mode<synchronous>, transform_indices = @transform_1, window_bounds = array<i64: 4, 36>}, {pipeline_mode = #tpu.pipeline_mode<synchronous>, transform_indices = @transform_2, window_bounds = array<i64: 4, 1>}, {transform_indices = @transform_3, window_bounds = array<i64: 1, 4, 64>}]} {
    %c0 = arith.constant 0 : index
    %c0_0 = arith.constant 0 : index
    %0 = vector.load %arg3[%c0, %c0_0] : memref<4x36xbf16, #tpu.memory_space<vmem>>, vector<4x36xbf16>
    %c0_1 = arith.constant 0 : index
    %c0_2 = arith.constant 0 : index
    %c0_3 = arith.constant 0 : index
    %1 = vector.load %arg2[%c0_1, %c0_2, %c0_3] : memref<1x36x64xbf16, #tpu.memory_space<vmem>>, vector<1x36x64xbf16>
    %2 = vector.shape_cast %1 : vector<1x36x64xbf16> to vector<36x64xbf16>
    %cst = arith.constant dense<0.000000e+00> : vector<4x64xf32>
    %3 = tpu.matmul %0, %2, %cst {dimension_numbers = #tpu.dot_dimension_numbers<[1], [0], [0], [1], [0, 0, 1, 1], [], []>} : vector<4x36xbf16>, vector<36x64xbf16>, vector<4x64xf32> -> vector<4x64xf32>
    %c0_4 = arith.constant 0 : index
    %c0_5 = arith.constant 0 : index
    %4 = vector.load %arg4[%c0_4, %c0_5] : memref<4x1xf32, #tpu.memory_space<vmem>>, vector<4x1xf32>
    %5 = vector.broadcast %4 : vector<4x1xf32> to vector<4x64xf32>
    %6 = arith.addf %3, %5 : vector<4x64xf32>
    %c0_6 = arith.constant 0 : index
    %c0_7 = arith.constant 0 : index
    %c0_8 = arith.constant 0 : index
    %7 = vector.load %arg5[%c0_6, %c0_7, %c0_8] : memref<1x4x64xf32, #tpu.memory_space<vmem>>, vector<1x4x64xf32>
    %8 = vector.shape_cast %7 : vector<1x4x64xf32> to vector<4x64xf32>
    %9 = vector.shape_cast %6 : vector<4x64xf32> to vector<1x4x64xf32>
    tpu.vector_store %arg5[%c0_6, %c0_7, %c0_8], %9 {strides = array<i32>} : memref<1x4x64xf32, #tpu.memory_space<vmem>>, vector<1x4x64xf32>,
    return
  }
  func.func @transform_0(%arg0: i32, %arg1: i32) -> (i32, i32, i32) {
    %c0_i32 = arith.constant 0 : i32
    %c0_i32_0 = arith.constant 0 : i32
    return %arg0, %c0_i32, %arg1 : i32, i32, i32
  }
  func.func @transform_1(%arg0: i32, %arg1: i32) -> (i32, i32) {
    %c0_i32 = arith.constant 0 : i32
    %c0_i32_0 = arith.constant 0 : i32
    %c0_i32_1 = arith.constant 0 : i32
    return %c0_i32, %c0_i32_0 : i32, i32
  }
  func.func @transform_2(%arg0: i32, %arg1: i32) -> (i32, i32) {
    %c0_i32 = arith.constant 0 : i32
    %c0_i32_0 = arith.constant 0 : i32
    %c0_i32_1 = arith.constant 0 : i32
    return %c0_i32, %c0_i32_0 : i32, i32
  }
  func.func @transform_3(%arg0: i32, %arg1: i32) -> (i32, i32, i32) {
    %c0_i32 = arith.constant 0 : i32
    %c0_i32_0 = arith.constant 0 : i32
    return %arg0, %c0_i32, %arg1 : i32, i32, i32
  }
}

</mosaic_0001>

<llo_original>
// kernel: _conv2d_s2_p1.1
$region0: #{_conv2d_s2_p1.1}
  #allocation0 [shape = 'u32[]', space=smem, size = 0x4, offset = 0x4, fixed_abs, tag = 'smem constant byte address 0x4 - core index']
  #allocation1 [shape = 'u32[72,128]{1,0:T(1,128)}', space=vmem, size = 0x9000, scoped, tag = 'internal scratch']
  %s0 = inlined_call_operand.vmem [shape: bf16[2,36,64], index: 0, kind: input, shape index: {}]
  %s1 = inlined_call_operand.vmem [shape: bf16[4,36], index: 1, kind: input, shape index: {}]
  %s2 = inlined_call_operand.vmem [shape: f32[4,1], index: 2, kind: input, shape index: {}]
  %s3 = inlined_call_operand.vmem [shape: f32[2,4,64], index: 3, kind: output, shape index: {}]
  %s4 = sld [smem:[#allocation0]]
  $region45: #{_conv2d_s2_p1.1} parent=0
    _
  %s6 = ssub.s32 1, %s4
  %s7 = scalar_select 0, %s6, %s4
  loop: start=0, step=1, limit=4
  $region2: #{_conv2d_s2_p1.1} parent=0 // loop_pre_header
    _
  $region3: #{_conv2d_s2_p1.1} parent=0 // loop_header
    %s9 = sphi 0, %s13
    %p10 = scmp.ge.s32.totalorder %s9, 4
    %s16 = sphi 0, %s28
    %s17 = sphi 0, %s24
    %s18 = sphi 0, %s16
    %s19 = sphi 0, %s17
    %s20 = sphi 0, %s18
    %s21 = sphi 0, %s19
    %s33 = sphi 0, %s35
    %s36 = sphi 0, %s33
    %s37 = sphi 0, %s36
    %s53 = sphi 0, %s37
    %s57 = sphi 0, %s57
    %s59 = sphi 0, %s57
    %s60 = sphi 0, %s59
    %s74 = sphi 0, %s60
    %s78 = sphi 0, %s78
    %s80 = sphi 0, %s78
    %s81 = sphi 0, %s80
    %s95 = sphi 0, %s81
    %s103 = sphi 0, %s105
    %s106 = sphi 0, %s103
    %s107 = sphi 0, %s106
    %s123 = sphi 0, %s107
  $region4: #{_conv2d_s2_p1.1} parent=0 // loop_header_branch
    %12 = sbr.rel (%p10) target = $region8
  $region5: #{_conv2d_s2_p1.1} parent=0 // loop_body
    %s14 = ssub.s32 %s9, 1
    %s15 = ssub.s32 %s9, 2
    %s22 = sadd.s32 1, %s17
    %p23 = scmp.ge.s32.totalorder %s22, 1
    %s24 = scalar_select %p23, 0, %s22
    %s25 = sadd.s32 1, %s16
    %s26 = scalar_select %p23, %s25, %s16
    %p27 = scmp.ge.s32.totalorder %s26, 2
    %s28 = scalar_select %p27, 0, %s26
    %s29 = ssub.s32 %s16, %s28
    %s30 = ssub.s32 %s17, %s24
    %s31 = sor.u32 %s29, %s30
    %p32 = scmp.eq.s32.totalorder %s31, 0
    %s34 = sadd.s32 %s33, 1
    %s35 = scalar_select %p32, %s33, %s34
    %p38 = pneg %p32
    %p39 = scmp.eq.s32.totalorder %s9, 1
    %p40 = por %p38, %p39
    %p41 = scmp.ne.s32.totalorder %s33, %s36
    %p42 = scmp.eq.s32.totalorder %s9, 0
    %p43 = por %p41, %p42
    %p44 = scmp.ne.s32.totalorder %s33, %s36
    %p45 = scmp.eq.s32.totalorder %s14, 1
    %p46 = por %p44, %p45
    %p47 = scmp.ne.s32.totalorder %s36, %s37
    %p48 = scmp.eq.s32.totalorder %s14, 0
    %p49 = por %p47, %p48
    %p50 = scmp.ne.s32.totalorder %s36, %s37
    %p51 = scmp.eq.s32.totalorder %s15, 1
    %p52 = por %p50, %p51
    %p54 = scmp.ne.s32.totalorder %s37, %s53
    %p55 = scmp.eq.s32.totalorder %s15, 0
    %p56 = por %p54, %p55
    %s58 = sadd.s32 %s57, 1
    %p61 = scmp.eq.s32.totalorder %s9, 1
    %p62 = scmp.ne.s32.totalorder %s57, %s59
    %p63 = scmp.eq.s32.totalorder %s9, 0
    %p64 = por %p62, %p63
    %p65 = scmp.ne.s32.totalorder %s57, %s59
    %p66 = scmp.eq.s32.totalorder %s14, 1
    %p67 = por %p65, %p66
    %p68 = scmp.ne.s32.totalorder %s59, %s60
    %p69 = scmp.eq.s32.totalorder %s14, 0
    %p70 = por %p68, %p69
    %p71 = scmp.ne.s32.totalorder %s59, %s60
    %p72 = scmp.eq.s32.totalorder %s15, 1
    %p73 = por %p71, %p72
    %p75 = scmp.ne.s32.totalorder %s60, %s74
    %p76 = scmp.eq.s32.totalorder %s15, 0
    %p77 = por %p75, %p76
    %s79 = sadd.s32 %s78, 1
    %p82 = scmp.eq.s32.totalorder %s9, 1
    %p83 = scmp.ne.s32.totalorder %s78, %s80
    %p84 = scmp.eq.s32.totalorder %s9, 0
    %p85 = por %p83, %p84
    %p86 = scmp.ne.s32.totalorder %s78, %s80
    %p87 = scmp.eq.s32.totalorder %s14, 1
    %p88 = por %p86, %p87
    %p89 = scmp.ne.s32.totalorder %s80, %s81
    %p90 = scmp.eq.s32.totalorder %s14, 0
    %p91 = por %p89, %p90
    %p92 = scmp.ne.s32.totalorder %s80, %s81
    %p93 = scmp.eq.s32.totalorder %s15, 1
    %p94 = por %p92, %p93
    %p96 = scmp.ne.s32.totalorder %s81, %s95
    %p97 = scmp.eq.s32.totalorder %s15, 0
    %p98 = por %p96, %p97
    %s99 = ssub.s32 %s16, %s28
    %s100 = ssub.s32 %s17, %s24
    %s101 = sor.u32 %s99, %s100
    %p102 = scmp.eq.s32.totalorder %s101, 0
    %s104 = sadd.s32 %s103, 1
    %s105 = scalar_select %p102, %s103, %s104
    %p108 = pneg %p102
    %p109 = scmp.eq.s32.totalorder %s9, 1
    %p110 = por %p108, %p109
    %p111 = scmp.ne.s32.totalorder %s103, %s106
    %p112 = scmp.eq.s32.totalorder %s9, 0
    %p113 = por %p111, %p112
    %p114 = scmp.ne.s32.totalorder %s103, %s106
    %p115 = scmp.eq.s32.totalorder %s14, 1
    %p116 = por %p114, %p115
    %p117 = scmp.ne.s32.totalorder %s106, %s107
    %p118 = scmp.eq.s32.totalorder %s14, 0
    %p119 = por %p117, %p118
    %p120 = scmp.ne.s32.totalorder %s106, %s107
    %p121 = scmp.eq.s32.totalorder %s15, 1
    %p122 = por %p120, %p121
    %p124 = scmp.ne.s32.totalorder %s107, %s123
    %p125 = scmp.eq.s32.totalorder %s15, 0
    %p126 = por %p124, %p125
    %p127 = scmp.le.s32.totalorder 1, %s9
    %p128 = scmp.lt.s32.totalorder %s9, 3
    %p129 = pnand %p127, %p128
    %p130 = pneg %p129
    // Predicated region
    $region9: #{_conv2d_s2_p1.1} parent=5 // pred_check
      _
    $region10: #{_conv2d_s2_p1.1} parent=5 // pred_check_branch
      %132 = sbr.rel (%p129) target = $region12
    $region11: #{_conv2d_s2_p1.1} parent=5 // pred_region
      %s133 = ssub.s32 %s9, 1
      // Predicated region
      $region13: #{_conv2d_s2_p1.1} parent=11 // pred_check
        %p134 = pneg %p70
      $region14: #{_conv2d_s2_p1.1} parent=11 // pred_check_branch
        %136 = sbr.rel (%p134) target = $region16
      $region15: #{_conv2d_s2_p1.1} parent=11 // pred_region
        _
      $region16: #{_conv2d_s2_p1.1} parent=11 // pred_fallthru
        _
      // Predicated region
      $region17: #{_conv2d_s2_p1.1} parent=11 // pred_check
        %p137 = pneg %p91
      $region18: #{_conv2d_s2_p1.1} parent=11 // pred_check_branch
        %139 = sbr.rel (%p137) target = $region20
      $region19: #{_conv2d_s2_p1.1} parent=11 // pred_region
        _
      $region20: #{_conv2d_s2_p1.1} parent=11 // pred_fallthru
        _
    $region12: #{_conv2d_s2_p1.1} parent=5 // pred_fallthru
      _
    %p140 = scmp.lt.s32.totalorder %s9, 2
    // Predicated region
    $region21: #{_conv2d_s2_p1.1} parent=5 // pred_check
      %p141 = pneg %p140
    $region22: #{_conv2d_s2_p1.1} parent=5 // pred_check_branch
      %143 = sbr.rel (%p141) target = $region24
    $region23: #{_conv2d_s2_p1.1} parent=5 // pred_region
      // Predicated region
      $region25: #{_conv2d_s2_p1.1} parent=23 // pred_check
        %p144 = pneg %p43
      $region26: #{_conv2d_s2_p1.1} parent=23 // pred_check_branch
        %146 = sbr.rel (%p144) target = $region28
      $region27: #{_conv2d_s2_p1.1} parent=23 // pred_region
        %p147 = scmp.lt.s32.totalorder %s16, 1
        %s148 = scalar_select %p147, %s16, 1
        %p149 = scmp.lt.s32.totalorder %s17, 0
        %s150 = scalar_select %p149, %s17, 0
        %s151 = smul.addr %s148, 5
        %s152 = sadd.s32 %s150, %s151
        %s153 = smul.addr %s152, 4
        %s154 = scalar_lea.vmem %s0, %s153
      $region28: #{_conv2d_s2_p1.1} parent=23 // pred_fallthru
        _
    $region24: #{_conv2d_s2_p1.1} parent=5 // pred_fallthru
      _
    %p155 = scmp.le.s32.totalorder 1, %s9
    %p156 = scmp.lt.s32.totalorder %s9, 3
    %p157 = pnand %p155, %p156
    %p158 = pneg %p157
    // Predicated region
    $region29: #{_conv2d_s2_p1.1} parent=5 // pred_check
      _
    $region30: #{_conv2d_s2_p1.1} parent=5 // pred_check_branch
      %160 = sbr.rel (%p157) target = $region32
    $region31: #{_conv2d_s2_p1.1} parent=5 // pred_region
      %s161 = ssub.s32 %s9, 1
      %p162 = scmp.lt.s32.totalorder %s18, 1
      %s163 = scalar_select %p162, %s18, 1
      %p164 = scmp.lt.s32.totalorder %s19, 0
      %s165 = scalar_select %p164, %s19, 0
      %s166 = smul.addr %s163, 5
      %s167 = sadd.s32 %s165, %s166
      %s168 = smul.addr %s167, 4
      %s169 = scalar_lea.vmem %s0, %s168
      %p170 = pneg %p49
      %p171 = pneg %p46
      %p172 = pneg %p70
      %p173 = pneg %p67
      %p174 = pneg %p91
      %p175 = pneg %p88
      %p176 = pneg %p119
      %p177 = pneg %p116
      %p178 = scmp.lt.s32.totalorder %s18, 1
      %s179 = scalar_select %p178, %s18, 1
      %p180 = scmp.lt.s32.totalorder %s19, 0
      %s181 = scalar_select %p180, %s19, 0
      %s182 = sadd.s32 %s181, %s179
      %s183 = smul.addr %s182, 4
      %s184 = scalar_lea.vmem %s3, %s183
      %p185 = scmp.lt.s32.totalorder %s18, 1
      %s186 = scalar_select %p185, %s18, 1
      %p187 = scmp.lt.s32.totalorder %s19, 0
      %s188 = scalar_select %p187, %s19, 0
      %s189 = smul.addr %s186, 5
      %s190 = sadd.s32 %s188, %s189
      %s191 = smul.addr %s190, 4
      %s192 = scalar_lea.vmem %s0, %s191
      %p193 = scmp.lt.s32.totalorder %s18, 1
      %s194 = scalar_select %p193, %s18, 1
      %p195 = scmp.lt.s32.totalorder %s19, 0
      %s196 = scalar_select %p195, %s19, 0
      %s197 = sadd.s32 %s196, %s194
      %s198 = smul.addr %s197, 4
      %s199 = scalar_lea.vmem %s3, %s198
      %v201 = vld [vmem:[%s1] sm:$0x3]
      %v202 = vld [vmem:[%s192] sm:$0xf]
      %v203 = vld [vmem:[%s192 + $0x4] sm:$0xf]
      %v204 = vld [vmem:[%s192 + $0x8] sm:$0xf]
      %v205 = vld [vmem:[%s192 + $0xc] sm:$0xf]
      %v206 = vld [vmem:[%s192 + $0x10] sm:$0x3]
      %v207 = vld [vmem:[%s2] sm:$0xf]
      %209 = vset.pattern.permute.xlu0 0
      %210 = vperm.xlu0 %209, %v207
      %v211 = vpop.permute.xlu0 %210
      %v218 = vunpack.c.l.b16 %v202
      %v219 = vunpack.c.l.b16 %v203
      %v220 = vunpack.c.l.b16 %v204
      %v221 = vunpack.c.l.b16 %v205
      %v222 = vunpack.c.l.b16 %v206
      %v223 = vpack.c.b16 %v219, %v218
      %v224 = vpack.c.b16 %v221, %v220
      %v225 = vpack.c.b16 %v222, %v222
      %vm228 = vcmask 293888
      %v230 = vsel %vm228, %v201, 0
      %vm232 = vcmask 1041408
      %v234 = vsel %vm232, %v225, 0
      %236 = vmatpush.bf16.msra.mxu0 0
      %237 = vmatpush.bf16.msra.mxu0 0
      %238 = vmatpush.bf16.msra.mxu0 0
      %239 = vmatpush.bf16.msra.mxu0 0
      %240 = vmatpush.bf16.msra.mxu0 0
      %241 = vmatpush.bf16.msra.mxu0 %v234
      %242 = vmatpush.bf16.msra.mxu0 %v224
      %243 = vmatpush.bf16.msra.mxu0 %v223
      %244 = vmatmul.bf16.gmra.mxu0 %v230
      %v245 = vpop.f32.mrf.mxu0
      %v246 = vadd.f32 %v211, %v245
      %v247 = vpop.f32.mrf.mxu0
      %248 = vdwg.mxu0
      %vm249 = vcmask 519168
      %250 = vst.msk [vmem:[%s199] sm:$0xf] %vm249, %v246
      %p251 = scmp.lt.s32.totalorder %s18, 1
      %s252 = scalar_select %p251, %s18, 1
      %p253 = scmp.lt.s32.totalorder %s19, 0
      %s254 = scalar_select %p253, %s19, 0
      %s255 = sadd.s32 %s254, %s252
      %s256 = smul.addr %s255, 4
      %s257 = scalar_lea.vmem %s3, %s256
      // Predicated region
      $region33: #{_conv2d_s2_p1.1} parent=31 // pred_check
        %p258 = pneg %p116
      $region34: #{_conv2d_s2_p1.1} parent=31 // pred_check_branch
        %260 = sbr.rel (%p258) target = $region36
      $region35: #{_conv2d_s2_p1.1} parent=31 // pred_region
        _
      $region36: #{_conv2d_s2_p1.1} parent=31 // pred_fallthru
        _
    $region32: #{_conv2d_s2_p1.1} parent=5 // pred_fallthru
      _
    %p261 = scmp.le.s32.totalorder 2, %s9
    // Predicated region
    $region37: #{_conv2d_s2_p1.1} parent=5 // pred_check
      %p262 = pneg %p261
    $region38: #{_conv2d_s2_p1.1} parent=5 // pred_check_branch
      %264 = sbr.rel (%p262) target = $region40
    $region39: #{_conv2d_s2_p1.1} parent=5 // pred_region
      %s265 = ssub.s32 %s9, 2
      // Predicated region
      $region41: #{_conv2d_s2_p1.1} parent=39 // pred_check
        %p266 = pneg %p122
      $region42: #{_conv2d_s2_p1.1} parent=39 // pred_check_branch
        %268 = sbr.rel (%p266) target = $region44
      $region43: #{_conv2d_s2_p1.1} parent=39 // pred_region
        %p269 = scmp.lt.s32.totalorder %s20, 1
        %s270 = scalar_select %p269, %s20, 1
        %p271 = scmp.lt.s32.totalorder %s21, 0
        %s272 = scalar_select %p271, %s21, 0
        %s273 = sadd.s32 %s272, %s270
        %s274 = smul.addr %s273, 4
        %s275 = scalar_lea.vmem %s3, %s274
      $region44: #{_conv2d_s2_p1.1} parent=39 // pred_fallthru
        _
    $region40: #{_conv2d_s2_p1.1} parent=5 // pred_fallthru
      _
  $region6: #{_conv2d_s2_p1.1} parent=0 // loop_footer
    %s13 = sadd.s32 1, %s9
  $region7: #{_conv2d_s2_p1.1} parent=0 // loop_footer_branch
    %8 = sbr.rel target = $region3
  $region8: #{_conv2d_s2_p1.1} parent=0 // loop_exit
    _

</llo_original>
